<compile_context>
chip_gen: v7x
topology: tpu7x:2x2x1
jax: 0.10.0
libtpu: 0.0.40
codegen_flags: <defaults>
</compile_context>

<pallas_src>
import jax
import jax.numpy as jnp
from jax.experimental import pallas as pl
from jax.experimental.pallas import tpu as pltpu


def _mixture_kernel(pi_ref, g_ref, mu_ref, sigma_ref,
                    idx_ref, mu_out_ref, sigma_out_ref):
    """One batch tile: Gumbel-max categorical sample + component gather."""
    TB, K = pi_ref.shape
    D = mu_ref.shape[-1]

    # ---- Categorical sampling via Gumbel-max ------------------------------
    # argmax(logits + gumbel) ~ Categorical(logits=pi)
    z = pi_ref[...].astype(jnp.float32) + g_ref[...]                      # (TB, K)

    comp2 = jax.lax.broadcasted_iota(jnp.int32, (TB, K), 1)
    z_max = jnp.max(z, axis=-1, keepdims=True)                            # (TB, 1)
    # Lowest index among ties (ties have probability zero with real Gumbels).
    idx = jnp.min(jnp.where(z >= z_max, comp2, K), axis=-1, keepdims=True)  # (TB,1) int32

    # ---- Gather selected component: boolean mask + reduce over K ----------
    comp3 = jax.lax.broadcasted_iota(jnp.int32, (TB, K, D), 1)
    sel = comp3 == idx[:, :, None]                                        # (TB, K, D) bool

    # Select-and-accumulate: one live tile per input, sum adds only zeros so
    # it is exact in the input dtype (works for f32 or bf16 inputs).
    mu_sel = jnp.sum(jnp.where(sel, mu_ref[...], jnp.zeros((), mu_ref.dtype)),
                     axis=1)                                              # (TB, D)
    sg_sel = jnp.sum(jnp.where(sel, sigma_ref[...], jnp.zeros((), sigma_ref.dtype)),
                     axis=1)                                              # (TB, D)

    idx_ref[...] = idx.astype(jnp.int32)
    mu_out_ref[...] = mu_sel.astype(mu_out_ref.dtype)
    sigma_out_ref[...] = sg_sel.astype(sigma_out_ref.dtype)


def _pick_batch_tile(B, K, D, mu_itemsize, sigma_itemsize, pi_itemsize):
    """Largest batch tile whose (double-buffered) blocks stay in a VMEM budget."""
    # Bytes streamed per batch row (mu + sigma dominate; pi + gumbel are small).
    row_bytes = K * D * (mu_itemsize + sigma_itemsize) + K * (pi_itemsize + 4)
    # ~6 MiB per in-flight buffer => double-buffered inputs stay well under the
    # 32 MiB scoped-VMEM limit requested below (safe on v5e/v6e/v7x alike).
    budget = 6 * 1024 * 1024
    tb = max(8, budget // max(row_bytes, 1))
    if B <= tb:
        return B                       # full batch: block == array dim, always legal
    return min(1024, (tb // 8) * 8)    # multiple of 8 keeps the sublane tiling legal


def mixture_forward(pi, mu, sigma, key, sample_for='train'):
    """Pallas TPU implementation of Mixture.forward.

    Returns (mu_selected, sigma_selected) for 'train' (the Normal parameters),
    or (mu_selected, sigma_selected, select_idx) otherwise.
    """
    B, K = pi.shape
    _, _, D = mu.shape

    # Gumbel noise drawn outside the kernel (jax.random), independent per row,
    # so the tiled kernel needs no per-tile PRNG seeding.
    gumbel = jax.random.gumbel(key, (B, K), dtype=jnp.float32)

    TB = _pick_batch_tile(B, K, D, mu.dtype.itemsize, sigma.dtype.itemsize,
                          pi.dtype.itemsize)
    grid = (pl.cdiv(B, TB),)

    idx2d, mu_sel, sigma_sel = pl.pallas_call(
        _mixture_kernel,
        grid=grid,
        in_specs=[
            pl.BlockSpec((TB, K), lambda i: (i, 0)),        # pi
            pl.BlockSpec((TB, K), lambda i: (i, 0)),        # gumbel noise
            pl.BlockSpec((TB, K, D), lambda i: (i, 0, 0)),  # mu
            pl.BlockSpec((TB, K, D), lambda i: (i, 0, 0)),  # sigma
        ],
        out_specs=(
            pl.BlockSpec((TB, 1), lambda i: (i, 0)),        # sampled index
            pl.BlockSpec((TB, D), lambda i: (i, 0)),        # mu_selected
            pl.BlockSpec((TB, D), lambda i: (i, 0)),        # sigma_selected
        ),
        out_shape=(
            jax.ShapeDtypeStruct((B, 1), jnp.int32),
            jax.ShapeDtypeStruct((B, D), jnp.float32),
            jax.ShapeDtypeStruct((B, D), jnp.float32),
        ),
        compiler_params=pltpu.CompilerParams(
            dimension_semantics=("parallel",),
            vmem_limit_bytes=32 * 1024 * 1024,
        ),
    )(pi, gumbel, mu, sigma)

    select_idx = idx2d[:, 0]
    if sample_for == 'train':
        # TODO(synk): Normal(loc, scale) distribution object has no Pallas
        # equivalent; return its parameters instead.
        return mu_sel, sigma_sel
    return mu_sel, sigma_sel, select_idx


if __name__ == "__main__":
    # Small shapes consistent with an MDN head: batch=8, K=8 mixtures, D=16.
    B, K, D = 8, 8, 16
    key = jax.random.PRNGKey(0)
    k_pi, k_mu, k_sg, k_sample = jax.random.split(key, 4)

    pi = jax.random.normal(k_pi, (B, K), dtype=jnp.float32)           # logits
    mu = jax.random.normal(k_mu, (B, K, D), dtype=jnp.float32)
    sigma = jnp.abs(jax.random.normal(k_sg, (B, K, D), dtype=jnp.float32)) + 0.1

    mu_sel, sigma_sel, idx = mixture_forward(pi, mu, sigma, k_sample,
                                             sample_for='test')
    jax.block_until_ready((mu_sel, sigma_sel, idx))

    # Sanity checks: selected rows must match a gather with the sampled idx,
    # sigma must stay positive, idx in range.
    mu_ref = mu[jnp.arange(B), idx, :]
    sigma_ref = sigma[jnp.arange(B), idx, :]
    assert jnp.allclose(mu_sel, mu_ref, atol=1e-6)
    assert jnp.allclose(sigma_sel, sigma_ref, atol=1e-6)
    assert bool(jnp.all((idx >= 0) & (idx < K)))
    assert bool(jnp.all(sigma_sel > 0))

    print("KERNEL_OK")
</pallas_src>

<mosaic_0001>
module attributes {stable_mosaic.version = 11 : i64} {
  func.func @_mixture_kernel(%arg0: i32, %arg1: memref<8x8xf32, #tpu.memory_space<vmem>>, %arg2: memref<8x8xf32, #tpu.memory_space<vmem>>, %arg3: memref<8x8x16xf32, #tpu.memory_space<vmem>>, %arg4: memref<8x8x16xf32, #tpu.memory_space<vmem>>, %arg5: memref<8x1xi32, #tpu.memory_space<vmem>>, %arg6: memref<8x16xf32, #tpu.memory_space<vmem>>, %arg7: memref<8x16xf32, #tpu.memory_space<vmem>>) attributes {dimension_semantics = [#tpu.dimension_semantics<parallel>], iteration_bounds = array<i64: 1>, scalar_prefetch = 0 : i64, scratch_operands = 0 : i64, tpu.core_type = #tpu.core_type<tc>, window_params = [{transform_indices = @transform_0, window_bounds = array<i64: 8, 8>}, {transform_indices = @transform_1, window_bounds = array<i64: 8, 8>}, {transform_indices = @transform_2, window_bounds = array<i64: 8, 8, 16>}, {transform_indices = @transform_3, window_bounds = array<i64: 8, 8, 16>}, {transform_indices = @transform_4, window_bounds = array<i64: 8, 1>}, {transform_indices = @transform_5, window_bounds = array<i64: 8, 16>}, {transform_indices = @transform_6, window_bounds = array<i64: 8, 16>}]} {
    %c0 = arith.constant 0 : index
    %c0_0 = arith.constant 0 : index
    %0 = vector.load %arg1[%c0, %c0_0] : memref<8x8xf32, #tpu.memory_space<vmem>>, vector<8x8xf32>
    %c0_1 = arith.constant 0 : index
    %c0_2 = arith.constant 0 : index
    %1 = vector.load %arg2[%c0_1, %c0_2] : memref<8x8xf32, #tpu.memory_space<vmem>>, vector<8x8xf32>
    %2 = arith.addf %0, %1 : vector<8x8xf32>
    %3 = tpu.iota {dimensions = array<i32: 1>} : vector<8x8xi32>
    %cst = arith.constant dense<0xFF800000> : vector<8xf32>
    %4 = vector.multi_reduction <maximumf>, %2, %cst [1] : vector<8x8xf32> to vector<8xf32>
    %5 = vector.shape_cast %4 : vector<8xf32> to vector<8x1xf32>
    %6 = vector.broadcast %5 : vector<8x1xf32> to vector<8x8xf32>
    %7 = arith.cmpf oge, %2, %6 : vector<8x8xf32>
    %c8_i32 = arith.constant 8 : i32
    %8 = vector.broadcast %c8_i32 : i32 to vector<8x8xi32>
    %9 = arith.select %7, %3, %8 : vector<8x8xi1>, vector<8x8xi32>
    %cst_3 = arith.constant dense<2147483647> : vector<8xi32>
    %10 = vector.multi_reduction <minsi>, %9, %cst_3 [1] : vector<8x8xi32> to vector<8xi32>
    %11 = vector.shape_cast %10 : vector<8xi32> to vector<8x1xi32>
    %12 = tpu.iota {dimensions = array<i32: 1>} : vector<8x8x16xi32>
    %13 = vector.shape_cast %11 : vector<8x1xi32> to vector<8x1x1xi32>
    %14 = vector.broadcast %13 : vector<8x1x1xi32> to vector<8x8x16xi32>
    %15 = arith.cmpi eq, %12, %14 : vector<8x8x16xi32>
    %c0_4 = arith.constant 0 : index
    %c0_5 = arith.constant 0 : index
    %c0_6 = arith.constant 0 : index
    %16 = vector.load %arg3[%c0_4, %c0_5, %c0_6] : memref<8x8x16xf32, #tpu.memory_space<vmem>>, vector<8x8x16xf32>
    %cst_7 = arith.constant 0.000000e+00 : f32
    %17 = vector.broadcast %cst_7 : f32 to vector<8x8x16xf32>
    %18 = arith.select %15, %16, %17 : vector<8x8x16xi1>, vector<8x8x16xf32>
    %cst_8 = arith.constant dense<0.000000e+00> : vector<8x16xf32>
    %19 = vector.multi_reduction <add>, %18, %cst_8 [1] : vector<8x8x16xf32> to vector<8x16xf32>
    %c0_9 = arith.constant 0 : index
    %c0_10 = arith.constant 0 : index
    %c0_11 = arith.constant 0 : index
    %20 = vector.load %arg4[%c0_9, %c0_10, %c0_11] : memref<8x8x16xf32, #tpu.memory_space<vmem>>, vector<8x8x16xf32>
    %cst_12 = arith.constant 0.000000e+00 : f32
    %21 = vector.broadcast %cst_12 : f32 to vector<8x8x16xf32>
    %22 = arith.select %15, %20, %21 : vector<8x8x16xi1>, vector<8x8x16xf32>
    %cst_13 = arith.constant dense<0.000000e+00> : vector<8x16xf32>
    %23 = vector.multi_reduction <add>, %22, %cst_13 [1] : vector<8x8x16xf32> to vector<8x16xf32>
    %c0_14 = arith.constant 0 : index
    %c0_15 = arith.constant 0 : index
    %24 = vector.load %arg5[%c0_14, %c0_15] : memref<8x1xi32, #tpu.memory_space<vmem>>, vector<8x1xi32>
    tpu.vector_store %arg5[%c0_14, %c0_15], %11 {strides = array<i32>} : memref<8x1xi32, #tpu.memory_space<vmem>>, vector<8x1xi32>,
    %c0_16 = arith.constant 0 : index
    %c0_17 = arith.constant 0 : index
    %25 = vector.load %arg6[%c0_16, %c0_17] : memref<8x16xf32, #tpu.memory_space<vmem>>, vector<8x16xf32>
    tpu.vector_store %arg6[%c0_16, %c0_17], %19 {strides = array<i32>} : memref<8x16xf32, #tpu.memory_space<vmem>>, vector<8x16xf32>,
    %c0_18 = arith.constant 0 : index
    %c0_19 = arith.constant 0 : index
    %26 = vector.load %arg7[%c0_18, %c0_19] : memref<8x16xf32, #tpu.memory_space<vmem>>, vector<8x16xf32>
    tpu.vector_store %arg7[%c0_18, %c0_19], %23 {strides = array<i32>} : memref<8x16xf32, #tpu.memory_space<vmem>>, vector<8x16xf32>,
    return
  }
  func.func @transform_0(%arg0: i32) -> (i32, i32) {
    %c0_i32 = arith.constant 0 : i32
    %c0_i32_0 = arith.constant 0 : i32
    return %arg0, %c0_i32 : i32, i32
  }
  func.func @transform_1(%arg0: i32) -> (i32, i32) {
    %c0_i32 = arith.constant 0 : i32
    %c0_i32_0 = arith.constant 0 : i32
    return %arg0, %c0_i32 : i32, i32
  }
  func.func @transform_2(%arg0: i32) -> (i32, i32, i32) {
    %c0_i32 = arith.constant 0 : i32
    %c0_i32_0 = arith.constant 0 : i32
    %c0_i32_1 = arith.constant 0 : i32
    return %arg0, %c0_i32, %c0_i32_0 : i32, i32, i32
  }
  func.func @transform_3(%arg0: i32) -> (i32, i32, i32) {
    %c0_i32 = arith.constant 0 : i32
    %c0_i32_0 = arith.constant 0 : i32
    %c0_i32_1 = arith.constant 0 : i32
    return %arg0, %c0_i32, %c0_i32_0 : i32, i32, i32
  }
  func.func @transform_4(%arg0: i32) -> (i32, i32) {
    %c0_i32 = arith.constant 0 : i32
    %c0_i32_0 = arith.constant 0 : i32
    return %arg0, %c0_i32 : i32, i32
  }
  func.func @transform_5(%arg0: i32) -> (i32, i32) {
    %c0_i32 = arith.constant 0 : i32
    %c0_i32_0 = arith.constant 0 : i32
    return %arg0, %c0_i32 : i32, i32
  }
  func.func @transform_6(%arg0: i32) -> (i32, i32) {
    %c0_i32 = arith.constant 0 : i32
    %c0_i32_0 = arith.constant 0 : i32
    return %arg0, %c0_i32 : i32, i32
  }
}

</mosaic_0001>

<llo_original>
// kernel: tpu_custom_call.1
$region0: #{tpu_custom_call.1}
  #allocation0 [shape = 'u32[]', space=smem, size = 0x4, offset = 0x4, fixed_abs, tag = 'smem constant byte address 0x4 - core index']
  #allocation1 [shape = 'u32[144,128]{1,0:T(1,128)}', space=vmem, size = 0x12000, scoped, tag = 'internal scratch']
  %s0 = inlined_call_operand.hbm [shape: f32[8,8], index: 0, kind: input, shape index: {}]
  %s1 = inlined_call_operand.hbm [shape: f32[8,8], index: 1, kind: input, shape index: {}]
  %s2 = inlined_call_operand.hbm [shape: f32[8,8,16], index: 2, kind: input, shape index: {}]
  %s3 = inlined_call_operand.hbm [shape: f32[8,8,16], index: 3, kind: input, shape index: {}]
  %s4 = inlined_call_operand.vmem [shape: s32[8,1], index: 4, kind: output, shape index: {0}]
  %s5 = inlined_call_operand.hbm [shape: f32[8,16], index: 5, kind: output, shape index: {1}]
  %s6 = inlined_call_operand.hbm [shape: f32[8,16], index: 6, kind: output, shape index: {2}]
  %7 = xla_tuple %s4, %s5, %s6
  %s8 = sld [smem:[#allocation0]]
  $region58: #{tpu_custom_call.1} parent=0
    _
  %s10 = ssub.s32 1, %s8
  %s11 = scalar_select 0, %s10, %s8
  $region1: #{tpu_custom_call.1} parent=0
    #allocation2 [shape = 'u8[4096]{0}', space=vmem, size = 0x1000, scoped, tag = 'input window, operand 0, single buffered']
    #allocation3 [shape = 's32[1]{0}', space=sflag, size = 0x4, scoped, tag = 'scoped memory for tpu_custom_call.1']
    #allocation4 [shape = 's32[1]{0}', space=sflag, size = 0x4, scoped, tag = 'scoped memory for tpu_custom_call.1']
    #allocation5 [shape = 'u8[4096]{0}', space=vmem, size = 0x1000, scoped, tag = 'input window, operand 1, single buffered']
    #allocation6 [shape = 's32[1]{0}', space=sflag, size = 0x4, scoped, tag = 'scoped memory for tpu_custom_call.1']
    #allocation7 [shape = 'u8[32768]{0}', space=vmem, size = 0x8000, scoped, tag = 'input window, operand 2, single buffered']
    #allocation8 [shape = 'u8[32768]{0}', space=vmem, size = 0x8000, scoped, tag = 'input window, operand 3, single buffered']
    #allocation9 [shape = 's32[1]{0}', space=sflag, size = 0x4, scoped, tag = 'scoped memory for tpu_custom_call.1']
    #allocation10 [shape = 'u8[4096]{0}', space=vmem, size = 0x1000, scoped, tag = 'output window, operand 1, single buffered']
    #allocation11 [shape = 'u8[4096]{0}', space=vmem, size = 0x1000, scoped, tag = 'output window, operand 2, single buffered']
    #allocation12 [shape = 's32[1]{0}', space=sflag, size = 0x4, scoped, tag = 'scoped memory for tpu_custom_call.1']
    %12 = vsyncpa [#allocation3], 0
    %13 = vsyncpa [#allocation6], 0
    %14 = vsyncpa [#allocation9], 0
    %15 = vsyncpa [#allocation4], 0
    %16 = vsyncpa [#allocation12], 0
    // Predicated region
    $region2: #{tpu_custom_call.1} parent=1 // pred_check
      _
    $region3: #{tpu_custom_call.1} parent=1 // pred_check_branch
      %18 = sbr.rel (0) target = $region5
    $region4: #{tpu_custom_call.1} parent=1 // pred_region
      %s20 = ssub.s32 128, 128
      %21 = vsyncadd [#allocation3], %s20
      %s23 = sshll.u32 [#allocation2], 4
      %s24 = int_to_ptr.vmem [resolvable:$true] %s23
      %26 = dma.hbm_to_vmem [thread:$0]  %s0, 128, %s24, [#allocation3]
    $region5: #{tpu_custom_call.1} parent=1 // pred_fallthru
      _
    // Predicated region
    $region6: #{tpu_custom_call.1} parent=1 // pred_check
      _
    $region7: #{tpu_custom_call.1} parent=1 // pred_check_branch
      %28 = sbr.rel (0) target = $region9
    $region8: #{tpu_custom_call.1} parent=1 // pred_region
      %s30 = ssub.s32 128, 128
      %31 = vsyncadd [#allocation6], %s30
      %s33 = sshll.u32 [#allocation5], 4
      %s34 = int_to_ptr.vmem [resolvable:$true] %s33
      %36 = dma.hbm_to_vmem [thread:$0]  %s1, 128, %s34, [#allocation6]
    $region9: #{tpu_custom_call.1} parent=1 // pred_fallthru
      _
    // Predicated region
    $region10: #{tpu_custom_call.1} parent=1 // pred_check
      _
    $region11: #{tpu_custom_call.1} parent=1 // pred_check_branch
      %38 = sbr.rel (0) target = $region13
    $region12: #{tpu_custom_call.1} parent=1 // pred_region
      %s40 = ssub.s32 1024, 1024
      %41 = vsyncadd [#allocation6], %s40
      %s42 = sshll.u32 [#allocation7], 4
      %s43 = int_to_ptr.vmem [resolvable:$true] %s42
      %48 = dma.hbm_to_vmem [thread:$0]  %s2, 1024, %s43, [#allocation6], 128, 128, 8
    $region13: #{tpu_custom_call.1} parent=1 // pred_fallthru
      _
    // Predicated region
    $region14: #{tpu_custom_call.1} parent=1 // pred_check
      _
    $region15: #{tpu_custom_call.1} parent=1 // pred_check_branch
      %50 = sbr.rel (0) target = $region17
    $region16: #{tpu_custom_call.1} parent=1 // pred_region
      %s52 = ssub.s32 1024, 1024
      %53 = vsyncadd [#allocation9], %s52
      %s54 = sshll.u32 [#allocation8], 4
      %s55 = int_to_ptr.vmem [resolvable:$true] %s54
      %60 = dma.hbm_to_vmem [thread:$0]  %s3, 1024, %s55, [#allocation9], 128, 128, 8
    $region17: #{tpu_custom_call.1} parent=1 // pred_fallthru
      _
    // Predicated region
    $region18: #{tpu_custom_call.1} parent=1 // pred_check
      _
    $region19: #{tpu_custom_call.1} parent=1 // pred_check_branch
      %62 = sbr.rel (0) target = $region21
    $region20: #{tpu_custom_call.1} parent=1 // pred_region
      %63 = dma.done [#allocation3], 128
    $region21: #{tpu_custom_call.1} parent=1 // pred_fallthru
      _
    // Predicated region
    $region22: #{tpu_custom_call.1} parent=1 // pred_check
      _
    $region23: #{tpu_custom_call.1} parent=1 // pred_check_branch
      %65 = sbr.rel (0) target = $region25
    $region24: #{tpu_custom_call.1} parent=1 // pred_region
      %66 = dma.done [#allocation6], 128
    $region25: #{tpu_custom_call.1} parent=1 // pred_fallthru
      _
    // Predicated region
    $region26: #{tpu_custom_call.1} parent=1 // pred_check
      _
    $region27: #{tpu_custom_call.1} parent=1 // pred_check_branch
      %68 = sbr.rel (0) target = $region29
    $region28: #{tpu_custom_call.1} parent=1 // pred_region
      %69 = dma.done [#allocation6], 1024
    $region29: #{tpu_custom_call.1} parent=1 // pred_fallthru
      _
    // Predicated region
    $region30: #{tpu_custom_call.1} parent=1 // pred_check
      _
    $region31: #{tpu_custom_call.1} parent=1 // pred_check_branch
      %71 = sbr.rel (0) target = $region33
    $region32: #{tpu_custom_call.1} parent=1 // pred_region
      %72 = dma.done [#allocation9], 1024
    $region33: #{tpu_custom_call.1} parent=1 // pred_fallthru
      _
    %v73 = vld [vmem:[#allocation2] sm:$0xff]
    %v74 = vld [vmem:[#allocation5] sm:$0xff]
    %v75 = vadd.f32 %v73, %v74
    %v76 = vlaneseq
    %v77 = vand.u32 %v76, 127
    %vm78 = vcmask 64512
    %v79 = vsel %vm78, %v75, -inf
    %80 = vmax.xlane.f32.xlu0 %v79
    %v81 = vpop.xlane.xlu0 %80
    %vm82 = vcmp.ge.f32.partialorder %v75, %v81
    %v83 = vsel %vm82, %v77, 8
    %v84 = vsel %vm78, %v83, 2147483647
    %v85 = vand.u32 %v84, 65535
    %v86 = vshra.s32 %v84, 16
    %v87 = vcvt.s32.f32 %v85
    %v88 = vcvt.s32.f32 %v86
    %89 = vmin.xlane.f32.xlu0 %v88
    %v90 = vpop.xlane.xlu0 %89
    %vm91 = vcmp.eq.f32.partialorder %v88, %v90
    %v92 = vsel %vm91, %v87, inf
    %93 = vmin.xlane.f32.xlu0 %v92
    %v94 = vpop.xlane.xlu0 %93
    %v95 = vcvt.f32.s32 %v94
    %v96 = vcvt.f32.s32 %v90
    %v97 = vshll.u32 %v96, 16
    %v98 = vadd.s32 %v97, %v95
    %v99 = vlaneseq
    %v100 = vshrl.u32 %v99, 7
    %v101 = vlaneseq
    %v102 = vshrl.u32 %v101, 7
    %v103 = vsub.s32 0, %v102
    %v104 = vrot.slane %v98, %v103
    %v105 = vlaneseq
    %v106 = vshrl.u32 %v105, 7
    %v107 = vsub.s32 1, %v106
    %v108 = vrot.slane %v98, %v107
    %v109 = vlaneseq
    %v110 = vshrl.u32 %v109, 7
    %v111 = vsub.s32 2, %v110
    %v112 = vrot.slane %v98, %v111
    %v113 = vlaneseq
    %v114 = vshrl.u32 %v113, 7
    %v115 = vsub.s32 3, %v114
    %v116 = vrot.slane %v98, %v115
    %v117 = vlaneseq
    %v118 = vshrl.u32 %v117, 7
    %v119 = vsub.s32 4, %v118
    %v120 = vrot.slane %v98, %v119
    %v121 = vlaneseq
    %v122 = vshrl.u32 %v121, 7
    %v123 = vsub.s32 5, %v122
    %v124 = vrot.slane %v98, %v123
    %v125 = vlaneseq
    %v126 = vshrl.u32 %v125, 7
    %v127 = vsub.s32 6, %v126
    %v128 = vrot.slane %v98, %v127
    %v129 = vlaneseq
    %v130 = vshrl.u32 %v129, 7
    %v131 = vsub.s32 7, %v130
    %v132 = vrot.slane %v98, %v131
    %vm133 = vcmp.eq.s32.totalorder %v100, %v104
    %vm134 = vcmp.eq.s32.totalorder %v100, %v108
    %vm135 = vcmp.eq.s32.totalorder %v100, %v112
    %vm136 = vcmp.eq.s32.totalorder %v100, %v116
    %vm137 = vcmp.eq.s32.totalorder %v100, %v120
    %vm138 = vcmp.eq.s32.totalorder %v100, %v124
    %vm139 = vcmp.eq.s32.totalorder %v100, %v128
    %vm140 = vcmp.eq.s32.totalorder %v100, %v132
    %v141 = vld [vmem:[#allocation7] sm:$0xff]
    %v142 = vld [vmem:[#allocation7 + $0x8] sm:$0xff]
    %v143 = vld [vmem:[#allocation7 + $0x10] sm:$0xff]
    %v144 = vld [vmem:[#allocation7 + $0x18] sm:$0xff]
    %v145 = vld [vmem:[#allocation7 + $0x20] sm:$0xff]
    %v146 = vld [vmem:[#allocation7 + $0x28] sm:$0xff]
    %v147 = vld [vmem:[#allocation7 + $0x30] sm:$0xff]
    %v148 = vld [vmem:[#allocation7 + $0x38] sm:$0xff]
    %v149 = vsel %vm133, %v141, 0.0
    %v150 = vsel %vm134, %v142, 0.0
    %v151 = vsel %vm135, %v143, 0.0
    %v152 = vsel %vm136, %v144, 0.0
    %v153 = vsel %vm137, %v145, 0.0
    %v154 = vsel %vm138, %v146, 0.0
    %v155 = vsel %vm139, %v147, 0.0
    %v156 = vsel %vm140, %v148, 0.0
    %vm157 = vcmask 130048
    %v158 = vsel %vm157, %v149, 0.0
    %v159 = vrot.slane %v158, 4
    %v160 = vadd.f32 %v158, %v159
    %v161 = vrot.slane %v160, 2
    %v162 = vadd.f32 %v160, %v161
    %v163 = vrot.slane %v162, 1
    %v164 = vadd.f32 %v162, %v163
    %v165 = vsel %vm157, %v150, 0.0
    %v166 = vrot.slane %v165, 4
    %v167 = vadd.f32 %v165, %v166
    %v168 = vrot.slane %v167, 2
    %v169 = vadd.f32 %v167, %v168
    %v170 = vrot.slane %v169, 1
    %v171 = vadd.f32 %v169, %v170
    %v172 = vsel %vm157, %v151, 0.0
    %v173 = vrot.slane %v172, 4
    %v174 = vadd.f32 %v172, %v173
    %v175 = vrot.slane %v174, 2
    %v176 = vadd.f32 %v174, %v175
    %v177 = vrot.slane %v176, 1
    %v178 = vadd.f32 %v176, %v177
    %v179 = vsel %vm157, %v152, 0.0
    %v180 = vrot.slane %v179, 4
    %v181 = vadd.f32 %v179, %v180
    %v182 = vrot.slane %v181, 2
    %v183 = vadd.f32 %v181, %v182
    %v184 = vrot.slane %v183, 1
    %v185 = vadd.f32 %v183, %v184
    %v186 = vsel %vm157, %v153, 0.0
    %v187 = vrot.slane %v186, 4
    %v188 = vadd.f32 %v186, %v187
    %v189 = vrot.slane %v188, 2
    %v190 = vadd.f32 %v188, %v189
    %v191 = vrot.slane %v190, 1
    %v192 = vadd.f32 %v190, %v191
    %v193 = vsel %vm157, %v154, 0.0
    %v194 = vrot.slane %v193, 4
    %v195 = vadd.f32 %v193, %v194
    %v196 = vrot.slane %v195, 2
    %v197 = vadd.f32 %v195, %v196
    %v198 = vrot.slane %v197, 1
    %v199 = vadd.f32 %v197, %v198
    %v200 = vsel %vm157, %v155, 0.0
    %v201 = vrot.slane %v200, 4
    %v202 = vadd.f32 %v200, %v201
    %v203 = vrot.slane %v202, 2
    %v204 = vadd.f32 %v202, %v203
    %v205 = vrot.slane %v204, 1
    %v206 = vadd.f32 %v204, %v205
    %v207 = vsel %vm157, %v156, 0.0
    %v208 = vrot.slane %v207, 4
    %v209 = vadd.f32 %v207, %v208
    %v210 = vrot.slane %v209, 2
    %v211 = vadd.f32 %v209, %v210
    %v212 = vrot.slane %v211, 1
    %v213 = vadd.f32 %v211, %v212
    %v214 = vld [vmem:[#allocation8] sm:$0xff]
    %v215 = vld [vmem:[#allocation8 + $0x8] sm:$0xff]
    %v216 = vld [vmem:[#allocation8 + $0x10] sm:$0xff]
    %v217 = vld [vmem:[#allocation8 + $0x18] sm:$0xff]
    %v218 = vld [vmem:[#allocation8 + $0x20] sm:$0xff]
    %v219 = vld [vmem:[#allocation8 + $0x28] sm:$0xff]
    %v220 = vld [vmem:[#allocation8 + $0x30] sm:$0xff]
    %v221 = vld [vmem:[#allocation8 + $0x38] sm:$0xff]
    %v222 = vsel %vm133, %v214, 0.0
    %v223 = vsel %vm134, %v215, 0.0
    %v224 = vsel %vm135, %v216, 0.0
    %v225 = vsel %vm136, %v217, 0.0
    %v226 = vsel %vm137, %v218, 0.0
    %v227 = vsel %vm138, %v219, 0.0
    %v228 = vsel %vm139, %v220, 0.0
    %v229 = vsel %vm140, %v221, 0.0
    %v230 = vsel %vm157, %v222, 0.0
    %v231 = vrot.slane %v230, 4
    %v232 = vadd.f32 %v230, %v231
    %v233 = vrot.slane %v232, 2
    %v234 = vadd.f32 %v232, %v233
    %v235 = vrot.slane %v234, 1
    %v236 = vadd.f32 %v234, %v235
    %v237 = vsel %vm157, %v223, 0.0
    %v238 = vrot.slane %v237, 4
    %v239 = vadd.f32 %v237, %v238
    %v240 = vrot.slane %v239, 2
    %v241 = vadd.f32 %v239, %v240
    %v242 = vrot.slane %v241, 1
    %v243 = vadd.f32 %v241, %v242
    %v244 = vsel %vm157, %v224, 0.0
    %v245 = vrot.slane %v244, 4
    %v246 = vadd.f32 %v244, %v245
    %v247 = vrot.slane %v246, 2
    %v248 = vadd.f32 %v246, %v247
    %v249 = vrot.slane %v248, 1
    %v250 = vadd.f32 %v248, %v249
    %v251 = vsel %vm157, %v225, 0.0
    %v252 = vrot.slane %v251, 4
    %v253 = vadd.f32 %v251, %v252
    %v254 = vrot.slane %v253, 2
    %v255 = vadd.f32 %v253, %v254
    %v256 = vrot.slane %v255, 1
    %v257 = vadd.f32 %v255, %v256
    %v258 = vsel %vm157, %v226, 0.0
    %v259 = vrot.slane %v258, 4
    %v260 = vadd.f32 %v258, %v259
    %v261 = vrot.slane %v260, 2
    %v262 = vadd.f32 %v260, %v261
    %v263 = vrot.slane %v262, 1
    %v264 = vadd.f32 %v262, %v263
    %v265 = vsel %vm157, %v227, 0.0
    %v266 = vrot.slane %v265, 4
    %v267 = vadd.f32 %v265, %v266
    %v268 = vrot.slane %v267, 2
    %v269 = vadd.f32 %v267, %v268
    %v270 = vrot.slane %v269, 1
    %v271 = vadd.f32 %v269, %v270
    %v272 = vsel %vm157, %v228, 0.0
    %v273 = vrot.slane %v272, 4
    %v274 = vadd.f32 %v272, %v273
    %v275 = vrot.slane %v274, 2
    %v276 = vadd.f32 %v274, %v275
    %v277 = vrot.slane %v276, 1
    %v278 = vadd.f32 %v276, %v277
    %v279 = vsel %vm157, %v229, 0.0
    %v280 = vrot.slane %v279, 4
    %v281 = vadd.f32 %v279, %v280
    %v282 = vrot.slane %v281, 2
    %v283 = vadd.f32 %v281, %v282
    %v284 = vrot.slane %v283, 1
    %v285 = vadd.f32 %v283, %v284
    %vm286 = vcmask 7168
    %287 = vst.msk [vmem:[%s4] sm:$0xff] %vm286, %v98
    %vm296 = vcmask 1041409
    %v297 = vsel %vm296, %v171, %v164
    %vm298 = vcmask 1042434
    %v299 = vsel %vm298, %v178, %v297
    %vm300 = vcmask 1043459
    %v301 = vsel %vm300, %v185, %v299
    %vm302 = vcmask 1044484
    %v303 = vsel %vm302, %v192, %v301
    %vm304 = vcmask 1045509
    %v305 = vsel %vm304, %v199, %v303
    %vm306 = vcmask 1046534
    %v307 = vsel %vm306, %v206, %v305
    %vm308 = vcmask 1047559
    %v309 = vsel %vm308, %v213, %v307
    %311 = vst.msk [vmem:[#allocation10] sm:$0xff] %vm157, %v309
    %v320 = vsel %vm296, %v243, %v236
    %v321 = vsel %vm298, %v250, %v320
    %v322 = vsel %vm300, %v257, %v321
    %v323 = vsel %vm302, %v264, %v322
    %v324 = vsel %vm304, %v271, %v323
    %v325 = vsel %vm306, %v278, %v324
    %v326 = vsel %vm308, %v285, %v325
    %328 = vst.msk [vmem:[#allocation11] sm:$0xff] %vm157, %v326
    // Predicated region
    $region34: #{tpu_custom_call.1} parent=1 // pred_check
      _
    $region35: #{tpu_custom_call.1} parent=1 // pred_check_branch
      %330 = sbr.rel (0) target = $region37
    $region36: #{tpu_custom_call.1} parent=1 // pred_region
      _
    $region37: #{tpu_custom_call.1} parent=1 // pred_fallthru
      _
    // Predicated region
    $region38: #{tpu_custom_call.1} parent=1 // pred_check
      _
    $region39: #{tpu_custom_call.1} parent=1 // pred_check_branch
      %332 = sbr.rel (0) target = $region41
    $region40: #{tpu_custom_call.1} parent=1 // pred_region
      %s334 = ssub.s32 128, 128
      %335 = vsyncadd [#allocation4], %s334
      %s337 = sshll.u32 [#allocation10], 4
      %s338 = int_to_ptr.vmem [resolvable:$true] %s337
      %340 = dma.vmem_to_hbm [thread:$0]  %s338, 128, %s5, [#allocation4]
    $region41: #{tpu_custom_call.1} parent=1 // pred_fallthru
      _
    // Predicated region
    $region42: #{tpu_custom_call.1} parent=1 // pred_check
      _
    $region43: #{tpu_custom_call.1} parent=1 // pred_check_branch
      %342 = sbr.rel (0) target = $region45
    $region44: #{tpu_custom_call.1} parent=1 // pred_region
      %s344 = ssub.s32 128, 128
      %345 = vsyncadd [#allocation12], %s344
      %s347 = sshll.u32 [#allocation11], 4
      %s348 = int_to_ptr.vmem [resolvable:$true] %s347
      %350 = dma.vmem_to_hbm [thread:$0]  %s348, 128, %s6, [#allocation12]
    $region45: #{tpu_custom_call.1} parent=1 // pred_fallthru
      _
    // Predicated region
    $region46: #{tpu_custom_call.1} parent=1 // pred_check
      _
    $region47: #{tpu_custom_call.1} parent=1 // pred_check_branch
      %352 = sbr.rel (0) target = $region49
    $region48: #{tpu_custom_call.1} parent=1 // pred_region
      _
    $region49: #{tpu_custom_call.1} parent=1 // pred_fallthru
      _
    // Predicated region
    $region50: #{tpu_custom_call.1} parent=1 // pred_check
      _
    $region51: #{tpu_custom_call.1} parent=1 // pred_check_branch
      %354 = sbr.rel (0) target = $region53
    $region52: #{tpu_custom_call.1} parent=1 // pred_region
      %355 = dma.done [#allocation4], 128
    $region53: #{tpu_custom_call.1} parent=1 // pred_fallthru
      _
    // Predicated region
    $region54: #{tpu_custom_call.1} parent=1 // pred_check
      _
    $region55: #{tpu_custom_call.1} parent=1 // pred_check_branch
      %357 = sbr.rel (0) target = $region57
    $region56: #{tpu_custom_call.1} parent=1 // pred_region
      %358 = dma.done [#allocation12], 128
    $region57: #{tpu_custom_call.1} parent=1 // pred_fallthru
      _
    %359 = vsyncpa [#allocation3], 1
    %360 = vsyncpa [#allocation6], 1
    %361 = vsyncpa [#allocation9], 1
    %362 = vsyncpa [#allocation4], 1
    %363 = vsyncpa [#allocation12], 1

</llo_original>
